<compile_context>
chip_gen: v5e
topology: v5e:2x2
jax: 0.10.0
libtpu: 0.0.40
codegen_flags: <defaults>
</compile_context>

<pallas_src>
import functools

import jax
import jax.numpy as jnp
from jax.experimental import pallas as pl
from jax.experimental.pallas import tpu as pltpu


def _clipped_relu_kernel(x_ref, o_ref, *, max_value):
    # x_ref / o_ref: (row_tile, LANES) VMEM tiles. Pure VPU elementwise work.
    x = x_ref[...]
    lo = jnp.zeros((), dtype=x.dtype)
    hi = jnp.asarray(max_value, dtype=x.dtype)
    o_ref[...] = jnp.minimum(jnp.maximum(x, lo), hi)


def clipped_relu(x, max_value=20.0):
    """Pallas-backed equivalent of ClippedReLU(max_value).forward(x).

    Works for any input shape/rank: the array is flattened, padded to a
    lane-dense (rows, 512) slab, processed tile-by-tile, and reshaped back.
    """
    orig_shape = x.shape
    dtype = x.dtype
    n = x.size

    LANES = 512  # lane-dense: large multiple of 128 -> unmasked vst

    flat = x.reshape(-1)
    n_pad = pl.cdiv(n, LANES) * LANES
    if n_pad != n:
        flat = jnp.pad(flat, (0, n_pad - n))
    rows = n_pad // LANES

    # Row tile: 256 rows (512 KiB f32 per tile) for large inputs; for small
    # inputs just pad rows to a sublane multiple of 8 and use a single tile.
    if rows >= 256:
        row_tile = 256
    else:
        row_tile = pl.cdiv(rows, 8) * 8
    rows_pad = pl.cdiv(rows, row_tile) * row_tile

    x2 = flat.reshape(rows, LANES)
    if rows_pad != rows:
        x2 = jnp.pad(x2, ((0, rows_pad - rows), (0, 0)))

    kernel = functools.partial(_clipped_relu_kernel, max_value=max_value)

    out = pl.pallas_call(
        kernel,
        out_shape=jax.ShapeDtypeStruct((rows_pad, LANES), dtype),
        grid=(rows_pad // row_tile,),
        in_specs=[pl.BlockSpec((row_tile, LANES), lambda r: (r, 0))],
        out_specs=pl.BlockSpec((row_tile, LANES), lambda r: (r, 0)),
        compiler_params=pltpu.CompilerParams(
            dimension_semantics=("parallel",),
        ),
    )(x2)

    return out.reshape(-1)[:n].reshape(orig_shape)


def _reference(x, max_value=20.0):
    """Pure-JAX reference mirroring torch.clamp(x, min=0, max=max_value)."""
    return jnp.clip(x, 0.0, max_value)


if __name__ == "__main__":
    key = jax.random.PRNGKey(0)
    B, C, H, W = 2, 4, 16, 16
    # Scale so values land both below 0 and above max_value=20.
    x = jax.random.normal(key, (B, C, H, W), dtype=jnp.float32) * 30.0

    y = clipped_relu(x, max_value=20.0)
    y = jax.block_until_ready(y)

    y_ref = _reference(x, max_value=20.0)
    assert y.shape == x.shape and y.dtype == x.dtype
    assert jnp.allclose(y, y_ref, atol=0.0, rtol=0.0), "mismatch vs reference"
    assert float(jnp.min(y)) >= 0.0 and float(jnp.max(y)) <= 20.0

    print("KERNEL_OK")
</pallas_src>

<mosaic_0001>
module attributes {stable_mosaic.version = 11 : i64} {
  func.func @_clipped_relu_kernel(%arg0: i32, %arg1: memref<8x512xf32, #tpu.memory_space<vmem>>, %arg2: memref<8x512xf32, #tpu.memory_space<vmem>>) attributes {dimension_semantics = [#tpu.dimension_semantics<parallel>], iteration_bounds = array<i64: 1>, scalar_prefetch = 0 : i64, scratch_operands = 0 : i64, tpu.core_type = #tpu.core_type<tc>, window_params = [{transform_indices = @transform_0, window_bounds = array<i64: 8, 512>}, {transform_indices = @transform_1, window_bounds = array<i64: 8, 512>}]} {
    %c0 = arith.constant 0 : index
    %c0_0 = arith.constant 0 : index
    %0 = vector.load %arg1[%c0, %c0_0] : memref<8x512xf32, #tpu.memory_space<vmem>>, vector<8x512xf32>
    %cst = arith.constant 0.000000e+00 : f32
    %1 = vector.broadcast %cst : f32 to vector<8x512xf32>
    %2 = arith.maximumf %0, %1 : vector<8x512xf32>
    %cst_1 = arith.constant 2.000000e+01 : f32
    %3 = vector.broadcast %cst_1 : f32 to vector<8x512xf32>
    %4 = arith.minimumf %2, %3 : vector<8x512xf32>
    %c0_2 = arith.constant 0 : index
    %c0_3 = arith.constant 0 : index
    %5 = vector.load %arg2[%c0_2, %c0_3] : memref<8x512xf32, #tpu.memory_space<vmem>>, vector<8x512xf32>
    tpu.vector_store %arg2[%c0_2, %c0_3], %4 {strides = array<i32>} : memref<8x512xf32, #tpu.memory_space<vmem>>, vector<8x512xf32>,
    return
  }
  func.func @transform_0(%arg0: i32) -> (i32, i32) {
    %c0_i32 = arith.constant 0 : i32
    %c0_i32_0 = arith.constant 0 : i32
    return %arg0, %c0_i32 : i32, i32
  }
  func.func @transform_1(%arg0: i32) -> (i32, i32) {
    %c0_i32 = arith.constant 0 : i32
    %c0_i32_0 = arith.constant 0 : i32
    return %arg0, %c0_i32 : i32, i32
  }
}

</mosaic_0001>

<llo_original>
// kernel: tpu_custom_call.1
$region0: #{tpu_custom_call.1}
  #allocation0 [shape = 'u32[]', space=smem, size = 0x4, offset = 0x4, fixed_abs, tag = 'smem constant byte address 0x4 - core index']
  #allocation1 [shape = 'u32[72,128]{1,0:T(1,128)}', space=vmem, size = 0x9000, scoped, tag = 'internal scratch']
  %s0 = inlined_call_operand.hbm [shape: f32[8,512], index: 0, kind: input, shape index: {}]
  %s1 = inlined_call_operand.hbm [shape: f32[8,512], index: 1, kind: output, shape index: {}]
  %s2 = sld [smem:[#allocation0]]
  $region18: #{tpu_custom_call.1} parent=0
    _
  %s4 = ssub.s32 1, %s2
  %s5 = scalar_select 0, %s4, %s2
  $region1: #{tpu_custom_call.1} parent=0
    #allocation2 [shape = 'u8[16384]{0}', space=vmem, size = 0x4000, scoped, tag = 'input window, operand 0, single buffered']
    #allocation3 [shape = 's32[1]{0}', space=sflag, size = 0x4, scoped, tag = 'scoped memory for tpu_custom_call.1']
    #allocation4 [shape = 's32[1]{0}', space=sflag, size = 0x4, scoped, tag = 'scoped memory for tpu_custom_call.1']
    #allocation5 [shape = 'u8[16384]{0}', space=vmem, size = 0x4000, scoped, tag = 'output window, operand 0, single buffered']
    %6 = vsyncpa [#allocation3], 0
    %7 = vsyncpa [#allocation4], 0
    // Predicated region
    $region2: #{tpu_custom_call.1} parent=1 // pred_check
      _
    $region3: #{tpu_custom_call.1} parent=1 // pred_check_branch
      %9 = sbr.rel (0) target = $region5
    $region4: #{tpu_custom_call.1} parent=1 // pred_region
      %11 = vsyncadd [#allocation3], 0
      %s13 = sshll.u32 %s0, 4
      %s14 = int_to_ptr.hbm [resolvable:$true] %s13
      %s15 = sshll.u32 [#allocation2], 4
      %s16 = int_to_ptr.vmem [resolvable:$true] %s15
      %18 = dma.hbm_to_vmem [thread:$0]  %s14, 512, %s16, [#allocation3]
    $region5: #{tpu_custom_call.1} parent=1 // pred_fallthru
      _
    // Predicated region
    $region6: #{tpu_custom_call.1} parent=1 // pred_check
      _
    $region7: #{tpu_custom_call.1} parent=1 // pred_check_branch
      %20 = sbr.rel (0) target = $region9
    $region8: #{tpu_custom_call.1} parent=1 // pred_region
      %22 = dma.done [#allocation3], 512
    $region9: #{tpu_custom_call.1} parent=1 // pred_fallthru
      _
    %v23 = vld [vmem:[#allocation2] sm:$0xff]
    %v24 = vld [vmem:[#allocation2 + $0x8] sm:$0xff]
    %v25 = vld [vmem:[#allocation2 + $0x10] sm:$0xff]
    %v26 = vld [vmem:[#allocation2 + $0x18] sm:$0xff]
    %v27 = vmax.f32 %v23, 0.0
    %v28 = vmax.f32 %v24, 0.0
    %v29 = vmax.f32 %v25, 0.0
    %v30 = vmax.f32 %v26, 0.0
    %v31 = vmin.f32 %v27, 20.0
    %v32 = vmin.f32 %v28, 20.0
    %v33 = vmin.f32 %v29, 20.0
    %v34 = vmin.f32 %v30, 20.0
    %35 = vst [vmem:[#allocation5] sm:$0xff] %v31
    %36 = vst [vmem:[#allocation5 + $0x8] sm:$0xff] %v32
    %37 = vst [vmem:[#allocation5 + $0x10] sm:$0xff] %v33
    %38 = vst [vmem:[#allocation5 + $0x18] sm:$0xff] %v34
    // Predicated region
    $region10: #{tpu_custom_call.1} parent=1 // pred_check
      _
    $region11: #{tpu_custom_call.1} parent=1 // pred_check_branch
      %40 = sbr.rel (0) target = $region13
    $region12: #{tpu_custom_call.1} parent=1 // pred_region
      %42 = vsyncadd [#allocation4], 0
      %s44 = sshll.u32 [#allocation5], 4
      %s45 = int_to_ptr.vmem [resolvable:$true] %s44
      %s46 = sshll.u32 %s1, 4
      %s47 = int_to_ptr.hbm [resolvable:$true] %s46
      %49 = dma.vmem_to_hbm [thread:$0]  %s45, 512, %s47, [#allocation4]
    $region13: #{tpu_custom_call.1} parent=1 // pred_fallthru
      _
    // Predicated region
    $region14: #{tpu_custom_call.1} parent=1 // pred_check
      _
    $region15: #{tpu_custom_call.1} parent=1 // pred_check_branch
      %51 = sbr.rel (0) target = $region17
    $region16: #{tpu_custom_call.1} parent=1 // pred_region
      %53 = dma.done [#allocation4], 512
    $region17: #{tpu_custom_call.1} parent=1 // pred_fallthru
      _
    %54 = vsyncpa [#allocation3], 1
    %55 = vsyncpa [#allocation4], 1

</llo_original>
